<compile_context>
chip_gen: v5e
topology: v5e:2x2
jax: 0.10.0
libtpu: 0.0.40
codegen_flags: <defaults>
</compile_context>

<pallas_src>
import functools

import jax
import jax.numpy as jnp
from jax import lax
from jax.experimental import pallas as pl
from jax.experimental.pallas import tpu as pltpu

EPS = 1e-5
_LANE = 128

_VMEM_LIMIT_CACHE = None


# ----------------------------------------------------------------------------
# VMEM / tiling helpers
# ----------------------------------------------------------------------------
def _vmem_limit_bytes():
    """Generation-aware scoped-VMEM limit (~75% of physical, capped at 96 MiB)."""
    global _VMEM_LIMIT_CACHE
    if _VMEM_LIMIT_CACHE is None:
        cap = 64 * 1024 * 1024                      # safe default (v7x physical)
        try:
            info = pltpu.get_tpu_info()
            cap = int(getattr(info, "vmem_capacity_bytes", cap)) or cap
        except Exception:
            pass
        _VMEM_LIMIT_CACHE = min(cap * 3 // 4, 96 * 1024 * 1024)
    return _VMEM_LIMIT_CACHE


def _tile_budget(vmem_limit):
    # ~80% of the scoped limit for the double-buffered (x + out) blocks.
    return vmem_limit * 4 // 5


def _sublane_mult(dtype):
    # Minimum sublane tile: f32 -> 8, bf16 -> 16, int8/fp8 -> 32.
    return (8 * 4) // jnp.dtype(dtype).itemsize


def _round_down(v, m):
    return (v // m) * m


def _round_up(v, m):
    return ((v + m - 1) // m) * m


def _pick_tile_c(block_rows, c, itemsize, budget):
    """Largest multiple-of-128 C tile whose (x + out) double-buffered blocks fit."""
    if c % _LANE != 0:
        return c                                    # full-extent last dim: always legal
    per_col = 2 * 2 * block_rows * itemsize         # in + out, 2 pipeline buffers
    tile = _round_down(max(budget // per_col, _LANE), _LANE)
    return max(_LANE, min(c, tile))


def _ensure_two_c_steps(tile_c, c):
    """Shrink tile_c so the C grid has >=2 steps (keeps both v7x TCs busy)."""
    if pl.cdiv(c, tile_c) >= 2:
        return tile_c
    if c % _LANE == 0 and c >= 2 * _LANE:
        return min(tile_c, _round_up(pl.cdiv(c, 2), _LANE))
    return tile_c


# ----------------------------------------------------------------------------
# Kernels
# ----------------------------------------------------------------------------
def _bn_chunk_kernel(x_ref, gamma_ref, beta_ref, o_ref, *, eps):
    """One (chunk, tile_c) block == one BN branch. Full-block loads/stores only.

    x_ref/o_ref: (chunk, tile_c); gamma_ref/beta_ref: (1, 1, tile_c).
    """
    x = x_ref[...].astype(jnp.float32)
    mean = jnp.mean(x, axis=0, keepdims=True)                  # (1, tile_c)
    diff = x - mean
    var = jnp.mean(diff * diff, axis=0, keepdims=True)         # biased var (train BN)
    inv = lax.rsqrt(var + eps)                                 # EUP slot
    g = gamma_ref[0].astype(jnp.float32)                       # (1, tile_c)
    b = beta_ref[0].astype(jnp.float32)
    # Reuse diff: o = diff * (inv*g) + b  (one mul + one add per element).
    o_ref[...] = (diff * (inv * g) + b).astype(o_ref.dtype)


def _bn_masked_kernel(x_ref, gamma_ref, beta_ref, o_ref, *, chunk, num_chunks, eps):
    """Full-N block; per-chunk stats via row masks; single whole-block store.

    x_ref/o_ref: (N, tile_c); gamma_ref/beta_ref: (num_chunks, tile_c).
    """
    n = x_ref.shape[0]
    x = x_ref[...].astype(jnp.float32)
    rows = lax.broadcasted_iota(jnp.int32, (n, 1), 0)
    inv_cnt = 1.0 / float(chunk)
    scale_rows = None
    shift_rows = None
    for i in range(num_chunks):                                # static: 2 or 3
        lo, hi = i * chunk, (i + 1) * chunk
        m = jnp.logical_and(rows >= lo, rows < hi)             # (n, 1)
        xm = jnp.where(m, x, 0.0)
        mean = jnp.sum(xm, axis=0, keepdims=True) * inv_cnt    # (1, tile_c)
        dm = jnp.where(m, x - mean, 0.0)
        var = jnp.sum(dm * dm, axis=0, keepdims=True) * inv_cnt
        inv = lax.rsqrt(var + eps)
        g = gamma_ref[i:i + 1, :].astype(jnp.float32)
        b = beta_ref[i:i + 1, :].astype(jnp.float32)
        scale = inv * g
        shift = b - mean * scale
        if scale_rows is None:
            scale_rows, shift_rows = scale, shift
        else:
            scale_rows = jnp.where(m, scale, scale_rows)
            shift_rows = jnp.where(m, shift, shift_rows)
    # One unmasked, lane-dense whole-block store per grid step.
    o_ref[...] = (x * scale_rows + shift_rows).astype(o_ref.dtype)


def _bn_eval_kernel(x_ref, scale_ref, shift_ref, o_ref):
    """Eval-mode BN over one (tile_n, tile_c) block: y = x*scale + shift."""
    x = x_ref[...].astype(jnp.float32)
    o_ref[...] = (x * scale_ref[...] + shift_ref[...]).astype(o_ref.dtype)


# ----------------------------------------------------------------------------
# Module-equivalent wrapper
# ----------------------------------------------------------------------------
class DSBN1dIDM:
    """JAX/Pallas equivalent of reid.models.dsbn_idm.DSBN1d_idm (forward only)."""

    def __init__(self, planes, min_pallas_bytes=256 * 1024):
        self.planes = planes
        self.min_pallas_bytes = min_pallas_bytes   # below this, use fused XLA path
        ones = jnp.ones((planes,), jnp.float32)
        zeros = jnp.zeros((planes,), jnp.float32)
        # nn.BatchNorm1d defaults: weight=1, bias=0, running_mean=0, running_var=1
        self.mix_w, self.mix_b = ones, zeros
        self.bns_w, self.bns_b = ones, zeros
        self.bnt_w, self.bnt_b = ones, zeros
        self.bnt_running_mean = zeros
        self.bnt_running_var = ones
        # TODO(synk): running_mean/var momentum updates of mix/BN_S/BN_T in
        # training mode are a stateful nn.BatchNorm1d side effect and are not
        # implemented here (forward values are unaffected).

    # ---- training: chunk sublane-aligned -> 2-D (chunk, C-tile) grid --------
    def _train_chunk_grid(self, x, gammas, betas, num_chunks):
        n, c = x.shape
        chunk = n // num_chunks
        itemsize = jnp.dtype(x.dtype).itemsize
        vmem_limit = _vmem_limit_bytes()
        tile_c = _pick_tile_c(chunk, c, itemsize, _tile_budget(vmem_limit))
        grid = (num_chunks, pl.cdiv(c, tile_c))
        gammas3 = gammas[:, None, :]                 # (num_chunks, 1, C)
        betas3 = betas[:, None, :]
        return pl.pallas_call(
            functools.partial(_bn_chunk_kernel, eps=EPS),
            out_shape=jax.ShapeDtypeStruct((n, c), x.dtype),
            grid_spec=pltpu.PrefetchScalarGridSpec(
                num_scalar_prefetch=0,
                grid=grid,
                in_specs=[
                    pl.BlockSpec((chunk, tile_c), lambda i, j: (i, j)),
                    pl.BlockSpec((1, 1, tile_c), lambda i, j: (i, 0, j)),
                    pl.BlockSpec((1, 1, tile_c), lambda i, j: (i, 0, j)),
                ],
                out_specs=pl.BlockSpec((chunk, tile_c), lambda i, j: (i, j)),
            ),
            compiler_params=pltpu.CompilerParams(
                dimension_semantics=("parallel", "parallel"),
                vmem_limit_bytes=vmem_limit,
            ),
        )(x, gammas3, betas3)

    # ---- training: chunk not aligned -> full-N block, masked stats ----------
    def _train_masked(self, x, gammas, betas, num_chunks):
        n, c = x.shape
        chunk = n // num_chunks
        itemsize = jnp.dtype(x.dtype).itemsize
        vmem_limit = _vmem_limit_bytes()
        tile_c = _pick_tile_c(n, c, itemsize, _tile_budget(vmem_limit))
        tile_c = _ensure_two_c_steps(tile_c, c)
        grid = (pl.cdiv(c, tile_c),)
        return pl.pallas_call(
            functools.partial(_bn_masked_kernel, chunk=chunk,
                              num_chunks=num_chunks, eps=EPS),
            out_shape=jax.ShapeDtypeStruct((n, c), x.dtype),
            grid_spec=pltpu.PrefetchScalarGridSpec(
                num_scalar_prefetch=0,
                grid=grid,
                in_specs=[
                    pl.BlockSpec((n, tile_c), lambda j: (0, j)),
                    pl.BlockSpec((num_chunks, tile_c), lambda j: (0, j)),
                    pl.BlockSpec((num_chunks, tile_c), lambda j: (0, j)),
                ],
                out_specs=pl.BlockSpec((n, tile_c), lambda j: (0, j)),
            ),
            compiler_params=pltpu.CompilerParams(
                dimension_semantics=("parallel",),
                vmem_limit_bytes=vmem_limit,
            ),
        )(x, gammas, betas)

    # ---- eval: 2-D (N-tile, C-tile) grid ------------------------------------
    def _eval_call(self, x):
        n, c = x.shape
        itemsize = jnp.dtype(x.dtype).itemsize
        sub = _sublane_mult(x.dtype)
        vmem_limit = _vmem_limit_bytes()
        budget = _tile_budget(vmem_limit)

        w = self.bnt_w.astype(jnp.float32)
        b = self.bnt_b.astype(jnp.float32)
        rm = self.bnt_running_mean.astype(jnp.float32)
        rv = self.bnt_running_var.astype(jnp.float32)
        inv = lax.rsqrt(rv + EPS)
        scale = (w * inv)[None, :]                   # (1, C)
        shift = (b - rm * w * inv)[None, :]          # (1, C)

        if n % sub == 0 and n > sub:
            # Tile both axes: lane-dense C tile, fill rows within the budget.
            tile_c = c if c % _LANE != 0 else min(c, 8 * _LANE)
            per_row = 2 * 2 * tile_c * itemsize
            tile_n = max(sub, min(n, _round_down(max(budget // per_row, sub), sub)))
        else:
            tile_n = n
            tile_c = _pick_tile_c(n, c, itemsize, budget)

        # Guarantee >= 2 grid steps when splittable (both v7x TensorCores busy).
        if pl.cdiv(n, tile_n) * pl.cdiv(c, tile_c) < 2:
            if n % sub == 0 and n >= 2 * sub:
                tile_n = _round_up(pl.cdiv(n, 2), sub)
            elif c % _LANE == 0 and c >= 2 * _LANE:
                tile_c = _round_up(pl.cdiv(c, 2), _LANE)

        grid = (pl.cdiv(n, tile_n), pl.cdiv(c, tile_c))
        return pl.pallas_call(
            _bn_eval_kernel,
            out_shape=jax.ShapeDtypeStruct((n, c), x.dtype),
            grid_spec=pltpu.PrefetchScalarGridSpec(
                num_scalar_prefetch=0,
                grid=grid,
                in_specs=[
                    pl.BlockSpec((tile_n, tile_c), lambda i, j: (i, j)),
                    pl.BlockSpec((1, tile_c), lambda i, j: (0, j)),
                    pl.BlockSpec((1, tile_c), lambda i, j: (0, j)),
                ],
                out_specs=pl.BlockSpec((tile_n, tile_c), lambda i, j: (i, j)),
            ),
            compiler_params=pltpu.CompilerParams(
                dimension_semantics=("parallel", "parallel"),
                vmem_limit_bytes=vmem_limit,
            ),
        )(x, scale, shift)

    # ---- pure-XLA fallbacks (tiny problems / VMEM safety net) ---------------
    def _jnp_bn_train(self, x, g, b):
        xf = x.astype(jnp.float32)
        mean = jnp.mean(xf, axis=0, keepdims=True)
        var = jnp.mean(jnp.square(xf - mean), axis=0, keepdims=True)
        y = (xf - mean) * lax.rsqrt(var + EPS) * g[None, :] + b[None, :]
        return y.astype(x.dtype)

    def _jnp_train(self, x, gammas, betas, num_chunks):
        chunk = x.shape[0] // num_chunks
        outs = [self._jnp_bn_train(x[i * chunk:(i + 1) * chunk], gammas[i], betas[i])
                for i in range(num_chunks)]
        return jnp.concatenate(outs, axis=0)

    def _jnp_eval(self, x):
        inv = lax.rsqrt(self.bnt_running_var.astype(jnp.float32) + EPS)
        y = ((x.astype(jnp.float32) - self.bnt_running_mean[None, :])
             * (self.bnt_w * inv)[None, :] + self.bnt_b[None, :])
        return y.astype(x.dtype)

    # ---- forward -------------------------------------------------------------
    def __call__(self, x, training=True):
        n, c = x.shape
        itemsize = jnp.dtype(x.dtype).itemsize
        nbytes = n * c * itemsize
        budget = _tile_budget(_vmem_limit_bytes())
        min_tile_c = c if c % _LANE != 0 else _LANE
        sub = _sublane_mult(x.dtype)

        if not training:
            min_rows = sub if (n % sub == 0 and n > sub) else n
            if (nbytes < self.min_pallas_bytes
                    or 2 * 2 * min_rows * min_tile_c * itemsize > budget):
                return self._jnp_eval(x)
            return self._eval_call(x)

        if n % 3 == 0:
            num_chunks = 3
            # chunk order matches torch.cat((out1, out3, out2)): BN_S, mix, BN_T
            gammas = jnp.stack([self.bns_w, self.mix_w, self.bnt_w], axis=0)
            betas = jnp.stack([self.bns_b, self.mix_b, self.bnt_b], axis=0)
        elif n % 2 == 0:
            num_chunks = 2
            gammas = jnp.stack([self.bns_w, self.bnt_w], axis=0)
            betas = jnp.stack([self.bns_b, self.bnt_b], axis=0)
        else:
            # The PyTorch module would raise UnboundLocalError here.
            raise ValueError("batch size must be divisible by 2 or 3 in training mode")

        chunk = n // num_chunks
        aligned = chunk % sub == 0
        block_rows = chunk if aligned else n
        if (nbytes < self.min_pallas_bytes
                or 2 * 2 * block_rows * min_tile_c * itemsize > budget):
            return self._jnp_train(x, gammas, betas, num_chunks)
        if aligned:
            return self._train_chunk_grid(x, gammas, betas, num_chunks)
        return self._train_masked(x, gammas, betas, num_chunks)


# ----------------------------------------------------------------------------
# Pure-JAX reference (mirrors the PyTorch module's forward)
# ----------------------------------------------------------------------------
def _ref_bn_train(x, g, b):
    mean = jnp.mean(x, axis=0, keepdims=True)
    var = jnp.mean((x - mean) ** 2, axis=0, keepdims=True)
    return (x - mean) / jnp.sqrt(var + EPS) * g[None, :] + b[None, :]


def _ref_forward(x, mod, training):
    if not training:
        inv = 1.0 / jnp.sqrt(mod.bnt_running_var + EPS)
        return ((x - mod.bnt_running_mean[None, :]) * inv[None, :]
                * mod.bnt_w[None, :] + mod.bnt_b[None, :])
    n = x.shape[0]
    if n % 3 == 0:
        ch = n // 3
        return jnp.concatenate([
            _ref_bn_train(x[:ch], mod.bns_w, mod.bns_b),
            _ref_bn_train(x[ch:2 * ch], mod.mix_w, mod.mix_b),
            _ref_bn_train(x[2 * ch:], mod.bnt_w, mod.bnt_b)], axis=0)
    ch = n // 2
    return jnp.concatenate([
        _ref_bn_train(x[:ch], mod.bns_w, mod.bns_b),
        _ref_bn_train(x[ch:], mod.bnt_w, mod.bnt_b)], axis=0)


# ----------------------------------------------------------------------------
if __name__ == "__main__":
    key = jax.random.PRNGKey(0)
    planes = 256
    k0, k1, k2, k3, k4, k5 = jax.random.split(key, 6)

    mod = DSBN1dIDM(planes, min_pallas_bytes=0)   # force the Pallas path at demo sizes
    # Non-trivial params / running stats so the checks are meaningful.
    mod.bns_w = 1.0 + 0.1 * jax.random.normal(k1, (planes,), jnp.float32)
    mod.mix_w = 1.0 + 0.1 * jax.random.normal(k2, (planes,), jnp.float32)
    mod.bnt_w = 1.0 + 0.1 * jax.random.normal(k3, (planes,), jnp.float32)
    mod.bns_b = 0.1 * jax.random.normal(k4, (planes,), jnp.float32)
    mod.mix_b = -mod.bns_b
    mod.bnt_b = 0.05 * jnp.ones((planes,), jnp.float32)
    mod.bnt_running_mean = 0.2 * jnp.ones((planes,), jnp.float32)
    mod.bnt_running_var = 1.5 * jnp.ones((planes,), jnp.float32)

    # bs % 3 == 0, chunk = 8 (sublane-aligned) -> chunk-grid kernel
    x3 = jax.random.normal(k0, (24, planes), jnp.float32)
    out3 = jax.block_until_ready(mod(x3, training=True))
    ref3 = _ref_forward(x3, mod, training=True)
    assert out3.shape == x3.shape
    assert jnp.allclose(out3, ref3, atol=1e-5, rtol=1e-5)

    # bs % 2 == 0, chunk = 8 -> chunk-grid kernel with 2 chunks
    x2 = jax.random.normal(k5, (16, planes), jnp.float32)
    out2 = jax.block_until_ready(mod(x2, training=True))
    ref2 = _ref_forward(x2, mod, training=True)
    assert jnp.allclose(out2, ref2, atol=1e-5, rtol=1e-5)

    # bs % 3 == 0 but chunk = 4 (not sublane-aligned) -> masked single-store kernel
    x3b = jax.random.normal(jax.random.PRNGKey(1), (12, planes), jnp.float32)
    out3b = jax.block_until_ready(mod(x3b, training=True))
    ref3b = _ref_forward(x3b, mod, training=True)
    assert jnp.allclose(out3b, ref3b, atol=1e-5, rtol=1e-5)

    # eval mode (running stats, N x C tiled grid)
    oute = jax.block_until_ready(mod(x3, training=False))
    refe = _ref_forward(x3, mod, training=False)
    assert jnp.allclose(oute, refe, atol=1e-5, rtol=1e-5)

    # planes not a multiple of 128 (full-C block path) + tiny batch
    mod_s = DSBN1dIDM(32, min_pallas_bytes=0)
    mod_s.bns_b = 0.3 * jnp.ones((32,), jnp.float32)
    mod_s.bnt_w = 1.25 * jnp.ones((32,), jnp.float32)
    xs = jax.random.normal(jax.random.PRNGKey(2), (6, 32), jnp.float32)
    outs = jax.block_until_ready(mod_s(xs, training=True))
    refs = _ref_forward(xs, mod_s, training=True)
    assert jnp.allclose(outs, refs, atol=1e-5, rtol=1e-5)

    # bf16 I/O (chunk = 16 rows = bf16 sublane tile; stats in f32 inside the kernel)
    xb = jax.random.normal(jax.random.PRNGKey(3), (48, planes),
                           jnp.float32).astype(jnp.bfloat16)
    outb = jax.block_until_ready(mod(xb, training=True))
    refb = _ref_forward(xb.astype(jnp.float32), mod, training=True)
    assert outb.dtype == jnp.bfloat16
    assert jnp.allclose(outb.astype(jnp.float32), refb, atol=3e-2, rtol=3e-2)

    # default threshold: tiny problems route to the fused XLA path (still correct)
    mod_d = DSBN1dIDM(planes)
    mod_d.bns_w, mod_d.mix_w, mod_d.bnt_w = mod.bns_w, mod.mix_w, mod.bnt_w
    mod_d.bns_b, mod_d.mix_b, mod_d.bnt_b = mod.bns_b, mod.mix_b, mod.bnt_b
    outd = jax.block_until_ready(mod_d(x3, training=True))
    assert jnp.allclose(outd, ref3, atol=1e-5, rtol=1e-5)

    print("KERNEL_OK")
</pallas_src>

<mosaic_0001>
module attributes {stable_mosaic.version = 11 : i64} {
  func.func @_bn_chunk_kernel(%arg0: i32, %arg1: i32, %arg2: memref<8x256xf32, #tpu.memory_space<vmem>>, %arg3: memref<1x1x256xf32, #tpu.memory_space<vmem>>, %arg4: memref<1x1x256xf32, #tpu.memory_space<vmem>>, %arg5: memref<8x256xf32, #tpu.memory_space<vmem>>) attributes {dimension_semantics = [#tpu.dimension_semantics<parallel>, #tpu.dimension_semantics<parallel>], iteration_bounds = array<i64: 3, 1>, scalar_prefetch = 0 : i64, scratch_operands = 0 : i64, tpu.core_type = #tpu.core_type<tc>, window_params = [{transform_indices = @transform_0, window_bounds = array<i64: 8, 256>}, {transform_indices = @transform_1, window_bounds = array<i64: 1, 1, 256>}, {transform_indices = @transform_2, window_bounds = array<i64: 1, 1, 256>}, {transform_indices = @transform_3, window_bounds = array<i64: 8, 256>}]} {
    %c0 = arith.constant 0 : index
    %c0_0 = arith.constant 0 : index
    %0 = vector.load %arg2[%c0, %c0_0] : memref<8x256xf32, #tpu.memory_space<vmem>>, vector<8x256xf32>
    %cst = arith.constant dense<0.000000e+00> : vector<256xf32>
    %1 = vector.multi_reduction <add>, %0, %cst [0] : vector<8x256xf32> to vector<256xf32>
    %2 = vector.shape_cast %1 : vector<256xf32> to vector<1x256xf32>
    %cst_1 = arith.constant 8.000000e+00 : f32
    %3 = vector.broadcast %cst_1 : f32 to vector<1x256xf32>
    %4 = arith.divf %2, %3 : vector<1x256xf32>
    %5 = vector.broadcast %4 : vector<1x256xf32> to vector<8x256xf32>
    %6 = arith.subf %0, %5 : vector<8x256xf32>
    %7 = arith.mulf %6, %6 : vector<8x256xf32>
    %cst_2 = arith.constant dense<0.000000e+00> : vector<256xf32>
    %8 = vector.multi_reduction <add>, %7, %cst_2 [0] : vector<8x256xf32> to vector<256xf32>
    %9 = vector.shape_cast %8 : vector<256xf32> to vector<1x256xf32>
    %cst_3 = arith.constant 8.000000e+00 : f32
    %10 = vector.broadcast %cst_3 : f32 to vector<1x256xf32>
    %11 = arith.divf %9, %10 : vector<1x256xf32>
    %cst_4 = arith.constant 9.99999974E-6 : f32
    %12 = vector.broadcast %cst_4 : f32 to vector<1x256xf32>
    %13 = arith.addf %11, %12 : vector<1x256xf32>
    %14 = math.rsqrt %13 : vector<1x256xf32>
    %c0_5 = arith.constant 0 : index
    %c0_6 = arith.constant 0 : index
    %c0_7 = arith.constant 0 : index
    %15 = vector.load %arg3[%c0_5, %c0_6, %c0_7] : memref<1x1x256xf32, #tpu.memory_space<vmem>>, vector<1x1x256xf32>
    %16 = vector.shape_cast %15 : vector<1x1x256xf32> to vector<1x256xf32>
    %c0_8 = arith.constant 0 : index
    %c0_9 = arith.constant 0 : index
    %c0_10 = arith.constant 0 : index
    %17 = vector.load %arg4[%c0_8, %c0_9, %c0_10] : memref<1x1x256xf32, #tpu.memory_space<vmem>>, vector<1x1x256xf32>
    %18 = vector.shape_cast %17 : vector<1x1x256xf32> to vector<1x256xf32>
    %19 = arith.mulf %14, %16 : vector<1x256xf32>
    %20 = vector.broadcast %19 : vector<1x256xf32> to vector<8x256xf32>
    %21 = arith.mulf %6, %20 : vector<8x256xf32>
    %22 = vector.broadcast %18 : vector<1x256xf32> to vector<8x256xf32>
    %23 = arith.addf %21, %22 : vector<8x256xf32>
    %c0_11 = arith.constant 0 : index
    %c0_12 = arith.constant 0 : index
    %24 = vector.load %arg5[%c0_11, %c0_12] : memref<8x256xf32, #tpu.memory_space<vmem>>, vector<8x256xf32>
    tpu.vector_store %arg5[%c0_11, %c0_12], %23 {strides = array<i32>} : memref<8x256xf32, #tpu.memory_space<vmem>>, vector<8x256xf32>,
    return
  }
  func.func @transform_0(%arg0: i32, %arg1: i32) -> (i32, i32) {
    %c0_i32 = arith.constant 0 : i32
    return %arg0, %arg1 : i32, i32
  }
  func.func @transform_1(%arg0: i32, %arg1: i32) -> (i32, i32, i32) {
    %c0_i32 = arith.constant 0 : i32
    %c0_i32_0 = arith.constant 0 : i32
    return %arg0, %c0_i32, %arg1 : i32, i32, i32
  }
  func.func @transform_2(%arg0: i32, %arg1: i32) -> (i32, i32, i32) {
    %c0_i32 = arith.constant 0 : i32
    %c0_i32_0 = arith.constant 0 : i32
    return %arg0, %c0_i32, %arg1 : i32, i32, i32
  }
  func.func @transform_3(%arg0: i32, %arg1: i32) -> (i32, i32) {
    %c0_i32 = arith.constant 0 : i32
    return %arg0, %arg1 : i32, i32
  }
}

</mosaic_0001>

<llo_original>
// kernel: tpu_custom_call.1
$region0: #{tpu_custom_call.1}
  #allocation0 [shape = 'u32[]', space=smem, size = 0x4, offset = 0x4, fixed_abs, tag = 'smem constant byte address 0x4 - core index']
  #allocation1 [shape = 'u32[72,128]{1,0:T(1,128)}', space=vmem, size = 0x9000, scoped, tag = 'internal scratch']
  %s0 = inlined_call_operand.hbm [shape: f32[24,256], index: 0, kind: input, shape index: {}]
  %s1 = inlined_call_operand.hbm [shape: f32[3,1,256], index: 1, kind: input, shape index: {}]
  %s2 = inlined_call_operand.hbm [shape: f32[3,1,256], index: 2, kind: input, shape index: {}]
  %s3 = inlined_call_operand.hbm [shape: f32[24,256], index: 3, kind: output, shape index: {}]
  %s4 = sld [smem:[#allocation0]]
  $region57: #{tpu_custom_call.1} parent=0
    _
  %s6 = ssub.s32 1, %s4
  %s7 = scalar_select 0, %s6, %s4
  $region1: #{tpu_custom_call.1} parent=0
    #allocation2 [shape = 'u8[16384]{0}', space=vmem, size = 0x4000, scoped, tag = 'input window, operand 0']
    #allocation3 [shape = 's32[2]{0}', space=sflag, size = 0x8, scoped, tag = 'scoped memory for tpu_custom_call.1']
    #allocation4 [shape = 's32[2]{0}', space=sflag, size = 0x8, scoped, tag = 'scoped memory for tpu_custom_call.1']
    #allocation5 [shape = 'u8[2048]{0}', space=vmem, size = 0x800, scoped, tag = 'input window, operand 1']
    #allocation6 [shape = 's32[2]{0}', space=sflag, size = 0x8, scoped, tag = 'scoped memory for tpu_custom_call.1']
    #allocation7 [shape = 'u8[2048]{0}', space=vmem, size = 0x800, scoped, tag = 'input window, operand 2']
    #allocation8 [shape = 'u8[16384]{0}', space=vmem, size = 0x4000, scoped, tag = 'output window, operand 0']
    %8 = vsyncpa [#allocation3], 0
    %s9 = scalar_lea.sflag [#allocation3], 1
    %10 = vsyncpa %s9, 0
    %11 = vsyncpa [#allocation6], 0
    %s12 = scalar_lea.sflag [#allocation6], 1
    %13 = vsyncpa %s12, 0
    %14 = vsyncpa [#allocation4], 0
    %s15 = scalar_lea.sflag [#allocation4], 1
    %16 = vsyncpa %s15, 0
    loop: start=0, step=1, limit=5
    $region2: #{tpu_custom_call.1} parent=1 // loop_pre_header
      _
    $region3: #{tpu_custom_call.1} parent=1 // loop_header
      %s18 = sphi 0, %s22
      %p19 = scmp.ge.s32.totalorder %s18, 5
      %s25 = sphi 0, %s37
      %s26 = sphi 0, %s33
      %s27 = sphi 0, %s25
      %s28 = sphi 0, %s26
      %s29 = sphi 0, %s27
      %s30 = sphi 0, %s28
      %s42 = sphi 0, %s44
      %s45 = sphi 0, %s42
      %s46 = sphi 0, %s45
      %s62 = sphi 0, %s46
      %s70 = sphi 0, %s72
      %s73 = sphi 0, %s70
      %s74 = sphi 0, %s73
      %s90 = sphi 0, %s74
      %s98 = sphi 0, %s100
      %s101 = sphi 0, %s98
      %s102 = sphi 0, %s101
      %s118 = sphi 0, %s102
      %s126 = sphi 0, %s128
      %s129 = sphi 0, %s126
      %s130 = sphi 0, %s129
      %s146 = sphi 0, %s130
    $region4: #{tpu_custom_call.1} parent=1 // loop_header_branch
      %21 = sbr.rel (%p19) target = $region8
    $region5: #{tpu_custom_call.1} parent=1 // loop_body
      %s23 = ssub.s32 %s18, 1
      %s24 = ssub.s32 %s18, 2
      %s31 = sadd.s32 1, %s26
      %p32 = scmp.ge.s32.totalorder %s31, 1
      %s33 = scalar_select %p32, 0, %s31
      %s34 = sadd.s32 1, %s25
      %s35 = scalar_select %p32, %s34, %s25
      %p36 = scmp.ge.s32.totalorder %s35, 3
      %s37 = scalar_select %p36, 0, %s35
      %s38 = ssub.s32 %s25, %s37
      %s39 = ssub.s32 %s26, %s33
      %s40 = sor.u32 %s38, %s39
      %p41 = scmp.eq.s32.totalorder %s40, 0
      %s43 = sadd.s32 %s42, 1
      %s44 = scalar_select %p41, %s42, %s43
      %p47 = pneg %p41
      %p48 = scmp.eq.s32.totalorder %s18, 2
      %p49 = por %p47, %p48
      %p50 = scmp.ne.s32.totalorder %s42, %s45
      %p51 = scmp.eq.s32.totalorder %s18, 0
      %p52 = por %p50, %p51
      %p53 = scmp.ne.s32.totalorder %s42, %s45
      %p54 = scmp.eq.s32.totalorder %s23, 2
      %p55 = por %p53, %p54
      %p56 = scmp.ne.s32.totalorder %s45, %s46
      %p57 = scmp.eq.s32.totalorder %s23, 0
      %p58 = por %p56, %p57
      %p59 = scmp.ne.s32.totalorder %s45, %s46
      %p60 = scmp.eq.s32.totalorder %s24, 2
      %p61 = por %p59, %p60
      %p63 = scmp.ne.s32.totalorder %s46, %s62
      %p64 = scmp.eq.s32.totalorder %s24, 0
      %p65 = por %p63, %p64
      %s66 = ssub.s32 %s25, %s37
      %s67 = ssub.s32 %s26, %s33
      %s68 = sor.u32 %s66, %s67
      %p69 = scmp.eq.s32.totalorder %s68, 0
      %s71 = sadd.s32 %s70, 1
      %s72 = scalar_select %p69, %s70, %s71
      %p75 = pneg %p69
      %p76 = scmp.eq.s32.totalorder %s18, 2
      %p77 = por %p75, %p76
      %p78 = scmp.ne.s32.totalorder %s70, %s73
      %p79 = scmp.eq.s32.totalorder %s18, 0
      %p80 = por %p78, %p79
      %p81 = scmp.ne.s32.totalorder %s70, %s73
      %p82 = scmp.eq.s32.totalorder %s23, 2
      %p83 = por %p81, %p82
      %p84 = scmp.ne.s32.totalorder %s73, %s74
      %p85 = scmp.eq.s32.totalorder %s23, 0
      %p86 = por %p84, %p85
      %p87 = scmp.ne.s32.totalorder %s73, %s74
      %p88 = scmp.eq.s32.totalorder %s24, 2
      %p89 = por %p87, %p88
      %p91 = scmp.ne.s32.totalorder %s74, %s90
      %p92 = scmp.eq.s32.totalorder %s24, 0
      %p93 = por %p91, %p92
      %s94 = ssub.s32 %s25, %s37
      %s95 = ssub.s32 %s26, %s33
      %s96 = sor.u32 %s94, %s95
      %p97 = scmp.eq.s32.totalorder %s96, 0
      %s99 = sadd.s32 %s98, 1
      %s100 = scalar_select %p97, %s98, %s99
      %p103 = pneg %p97
      %p104 = scmp.eq.s32.totalorder %s18, 2
      %p105 = por %p103, %p104
      %p106 = scmp.ne.s32.totalorder %s98, %s101
      %p107 = scmp.eq.s32.totalorder %s18, 0
      %p108 = por %p106, %p107
      %p109 = scmp.ne.s32.totalorder %s98, %s101
      %p110 = scmp.eq.s32.totalorder %s23, 2
      %p111 = por %p109, %p110
      %p112 = scmp.ne.s32.totalorder %s101, %s102
      %p113 = scmp.eq.s32.totalorder %s23, 0
      %p114 = por %p112, %p113
      %p115 = scmp.ne.s32.totalorder %s101, %s102
      %p116 = scmp.eq.s32.totalorder %s24, 2
      %p117 = por %p115, %p116
      %p119 = scmp.ne.s32.totalorder %s102, %s118
      %p120 = scmp.eq.s32.totalorder %s24, 0
      %p121 = por %p119, %p120
      %s122 = ssub.s32 %s25, %s37
      %s123 = ssub.s32 %s26, %s33
      %s124 = sor.u32 %s122, %s123
      %p125 = scmp.eq.s32.totalorder %s124, 0
      %s127 = sadd.s32 %s126, 1
      %s128 = scalar_select %p125, %s126, %s127
      %p131 = pneg %p125
      %p132 = scmp.eq.s32.totalorder %s18, 2
      %p133 = por %p131, %p132
      %p134 = scmp.ne.s32.totalorder %s126, %s129
      %p135 = scmp.eq.s32.totalorder %s18, 0
      %p136 = por %p134, %p135
      %p137 = scmp.ne.s32.totalorder %s126, %s129
      %p138 = scmp.eq.s32.totalorder %s23, 2
      %p139 = por %p137, %p138
      %p140 = scmp.ne.s32.totalorder %s129, %s130
      %p141 = scmp.eq.s32.totalorder %s23, 0
      %p142 = por %p140, %p141
      %p143 = scmp.ne.s32.totalorder %s129, %s130
      %p144 = scmp.eq.s32.totalorder %s24, 2
      %p145 = por %p143, %p144
      %p147 = scmp.ne.s32.totalorder %s130, %s146
      %p148 = scmp.eq.s32.totalorder %s24, 0
      %p149 = por %p147, %p148
      %p150 = scmp.le.s32.totalorder 1, %s18
      %p151 = scmp.lt.s32.totalorder %s18, 4
      %p152 = pnand %p150, %p151
      %p153 = pneg %p152
      // Predicated region
      $region9: #{tpu_custom_call.1} parent=5 // pred_check
        _
      $region10: #{tpu_custom_call.1} parent=5 // pred_check_branch
        %155 = sbr.rel (%p152) target = $region12
      $region11: #{tpu_custom_call.1} parent=5 // pred_region
        %s156 = ssub.s32 %s18, 1
      $region12: #{tpu_custom_call.1} parent=5 // pred_fallthru
        _
      %p157 = scmp.lt.s32.totalorder %s18, 3
      // Predicated region
      $region13: #{tpu_custom_call.1} parent=5 // pred_check
        %p158 = pneg %p157
      $region14: #{tpu_custom_call.1} parent=5 // pred_check_branch
        %160 = sbr.rel (%p158) target = $region16
      $region15: #{tpu_custom_call.1} parent=5 // pred_region
        // Predicated region
        $region17: #{tpu_custom_call.1} parent=15 // pred_check
          %p161 = pneg %p52
        $region18: #{tpu_custom_call.1} parent=15 // pred_check_branch
          %163 = sbr.rel (%p161) target = $region20
        $region19: #{tpu_custom_call.1} parent=15 // pred_region
          %s164 = sand.u32 %s42, 1
          %s165 = scalar_lea.sflag [#allocation3], %s164
          %s166 = sand.u32 %s42, 1
          %s167 = smul.addr %s166, 16
          %s168 = scalar_lea.vmem [#allocation2], %s167
          %s169 = smul.u32 2, %s26
          %171 = vsyncadd %s165, 0
          %s172 = smul.addr %s25, 2
          %s173 = sadd.s32 %s169, %s172
          %s174 = smul.addr %s173, 8
          %s175 = scalar_lea.hbm %s0, %s174
          %s177 = sshll.u32 %s175, 4
          %s178 = int_to_ptr.hbm [resolvable:$true] %s177
          %s179 = sshll.u32 %s168, 4
          %s180 = int_to_ptr.vmem [resolvable:$true] %s179
          %182 = dma.hbm_to_vmem [thread:$0]  %s178, 256, %s180, %s165
        $region20: #{tpu_custom_call.1} parent=15 // pred_fallthru
          _
        // Predicated region
        $region21: #{tpu_custom_call.1} parent=15 // pred_check
          %p183 = pneg %p80
        $region22: #{tpu_custom_call.1} parent=15 // pred_check_branch
          %185 = sbr.rel (%p183) target = $region24
        $region23: #{tpu_custom_call.1} parent=15 // pred_region
          %s186 = sand.u32 %s18, 1
          %s187 = scalar_lea.sflag [#allocation6], %s186
          %s188 = sand.u32 %s70, 1
          %s189 = smul.addr %s188, 2
          %s190 = scalar_lea.vmem [#allocation5], %s189
          %s191 = smul.u32 2, %s26
          %193 = vsyncadd %s187, 0
          %s194 = smul.addr %s25, 2
          %s195 = sadd.s32 %s191, %s194
          %s196 = scalar_lea.hbm %s1, %s195
          %s198 = sshll.u32 %s196, 4
          %s199 = int_to_ptr.hbm [resolvable:$true] %s198
          %s200 = sshll.u32 %s190, 4
          %s201 = int_to_ptr.vmem [resolvable:$true] %s200
          %203 = dma.hbm_to_vmem [thread:$0]  %s199, 32, %s201, %s187
        $region24: #{tpu_custom_call.1} parent=15 // pred_fallthru
          _
        // Predicated region
        $region25: #{tpu_custom_call.1} parent=15 // pred_check
          %p204 = pneg %p108
        $region26: #{tpu_custom_call.1} parent=15 // pred_check_branch
          %206 = sbr.rel (%p204) target = $region28
        $region27: #{tpu_custom_call.1} parent=15 // pred_region
          %s207 = sand.u32 %s18, 1
          %s208 = scalar_lea.sflag [#allocation6], %s207
          %s209 = sand.u32 %s98, 1
          %s210 = smul.addr %s209, 2
          %s211 = scalar_lea.vmem [#allocation7], %s210
          %s212 = smul.u32 2, %s26
          %214 = vsyncadd %s208, 0
          %s215 = smul.addr %s25, 2
          %s216 = sadd.s32 %s212, %s215
          %s217 = scalar_lea.hbm %s2, %s216
          %s219 = sshll.u32 %s217, 4
          %s220 = int_to_ptr.hbm [resolvable:$true] %s219
          %s221 = sshll.u32 %s211, 4
          %s222 = int_to_ptr.vmem [resolvable:$true] %s221
          %224 = dma.hbm_to_vmem [thread:$0]  %s220, 32, %s222, %s208
        $region28: #{tpu_custom_call.1} parent=15 // pred_fallthru
          _
      $region16: #{tpu_custom_call.1} parent=5 // pred_fallthru
        _
      %p225 = scmp.le.s32.totalorder 1, %s18
      %p226 = scmp.lt.s32.totalorder %s18, 4
      %p227 = pnand %p225, %p226
      %p228 = pneg %p227
      // Predicated region
      $region29: #{tpu_custom_call.1} parent=5 // pred_check
        _
      $region30: #{tpu_custom_call.1} parent=5 // pred_check_branch
        %230 = sbr.rel (%p227) target = $region32
      $region31: #{tpu_custom_call.1} parent=5 // pred_region
        %s231 = ssub.s32 %s18, 1
        %s232 = sand.u32 %s45, 1
        %s233 = scalar_lea.sflag [#allocation3], %s232
        %s234 = sand.u32 %s45, 1
        %s235 = smul.addr %s234, 16
        %s236 = scalar_lea.vmem [#allocation2], %s235
        // Predicated region
        $region33: #{tpu_custom_call.1} parent=31 // pred_check
          %p237 = pneg %p58
        $region34: #{tpu_custom_call.1} parent=31 // pred_check_branch
          %239 = sbr.rel (%p237) target = $region36
        $region35: #{tpu_custom_call.1} parent=31 // pred_region
          %241 = dma.done %s233, 256
        $region36: #{tpu_custom_call.1} parent=31 // pred_fallthru
          _
        %s242 = sand.u32 %s23, 1
        %s243 = scalar_lea.sflag [#allocation6], %s242
        %s244 = sand.u32 %s73, 1
        %s245 = smul.addr %s244, 2
        %s246 = scalar_lea.vmem [#allocation5], %s245
        // Predicated region
        $region37: #{tpu_custom_call.1} parent=31 // pred_check
          %p247 = pneg %p86
        $region38: #{tpu_custom_call.1} parent=31 // pred_check_branch
          %249 = sbr.rel (%p247) target = $region40
        $region39: #{tpu_custom_call.1} parent=31 // pred_region
          %251 = dma.done %s243, 32
        $region40: #{tpu_custom_call.1} parent=31 // pred_fallthru
          _
        %s252 = sand.u32 %s23, 1
        %s253 = scalar_lea.sflag [#allocation6], %s252
        %s254 = sand.u32 %s101, 1
        %s255 = smul.addr %s254, 2
        %s256 = scalar_lea.vmem [#allocation7], %s255
        // Predicated region
        $region41: #{tpu_custom_call.1} parent=31 // pred_check
          %p257 = pneg %p114
        $region42: #{tpu_custom_call.1} parent=31 // pred_check_branch
          %259 = sbr.rel (%p257) target = $region44
        $region43: #{tpu_custom_call.1} parent=31 // pred_region
          %261 = dma.done %s253, 32
        $region44: #{tpu_custom_call.1} parent=31 // pred_fallthru
          _
        %s262 = sand.u32 %s45, 1
        %s263 = scalar_lea.sflag [#allocation3], %s262
        %s264 = sand.u32 %s45, 1
        %s265 = smul.addr %s264, 16
        %s266 = scalar_lea.vmem [#allocation2], %s265
        %p267 = pneg %p58
        %p268 = pneg %p55
        %s269 = sand.u32 %s23, 1
        %s270 = scalar_lea.sflag [#allocation6], %s269
        %s271 = sand.u32 %s73, 1
        %s272 = smul.addr %s271, 2
        %s273 = scalar_lea.vmem [#allocation5], %s272
        %p274 = pneg %p86
        %p275 = pneg %p83
        %s276 = sand.u32 %s23, 1
        %s277 = scalar_lea.sflag [#allocation6], %s276
        %s278 = sand.u32 %s101, 1
        %s279 = smul.addr %s278, 2
        %s280 = scalar_lea.vmem [#allocation7], %s279
        %p281 = pneg %p114
        %p282 = pneg %p111
        %p283 = pneg %p142
        %p284 = pneg %p139
        %s285 = sand.u32 %s129, 1
        %s286 = scalar_lea.sflag [#allocation4], %s285
        %s287 = sand.u32 %s129, 1
        %s288 = smul.addr %s287, 16
        %s289 = scalar_lea.vmem [#allocation8], %s288
        %s290 = smul.u32 2, %s28
        %s291 = smul.u32 2, %s28
        %s292 = smul.u32 2, %s28
        %s293 = smul.u32 2, %s28
        %v294 = vld [vmem:[%s236] sm:$0xff]
        %v295 = vld [vmem:[%s236 + $0x8] sm:$0xff]
        %v296 = vrot.slane %v294, 4
        %v297 = vadd.f32 %v294, %v296
        %v298 = vrot.slane %v297, 2
        %v299 = vadd.f32 %v297, %v298
        %v300 = vrot.slane %v299, 1
        %v301 = vadd.f32 %v299, %v300
        %v302 = vrot.slane %v295, 4
        %v303 = vadd.f32 %v295, %v302
        %v304 = vrot.slane %v303, 2
        %v305 = vadd.f32 %v303, %v304
        %v306 = vrot.slane %v305, 1
        %v307 = vadd.f32 %v305, %v306
        %v308 = vrcp.pop 8.0
        %v309 = vmul.f32 8.0, %v308
        %v310 = vsub.f32 1.0, %v309
        %v311 = vmul.f32 %v308, %v310
        %v312 = vadd.f32 %v308, %v311
        %vm313 = vweird.f32 %v308
        %v314 = vsel %vm313, %v308, %v312
        %v315 = vmul.f32 %v301, %v314
        %v316 = vmul.f32 %v307, %v314
        %v317 = vsub.f32 %v294, %v315
        %v318 = vsub.f32 %v295, %v316
        %v319 = vmul.f32 %v317, %v317
        %v320 = vmul.f32 %v318, %v318
        %v321 = vrot.slane %v319, 4
        %v322 = vadd.f32 %v319, %v321
        %v323 = vrot.slane %v322, 2
        %v324 = vadd.f32 %v322, %v323
        %v325 = vrot.slane %v324, 1
        %v326 = vadd.f32 %v324, %v325
        %v327 = vrot.slane %v320, 4
        %v328 = vadd.f32 %v320, %v327
        %v329 = vrot.slane %v328, 2
        %v330 = vadd.f32 %v328, %v329
        %v331 = vrot.slane %v330, 1
        %v332 = vadd.f32 %v330, %v331
        %v333 = vmul.f32 %v326, %v314
        %v334 = vmul.f32 %v332, %v314
        %v335 = vadd.f32 %v333, 1e-05
        %v336 = vadd.f32 %v334, 1e-05
        %v337 = vrsqrt.pop %v335
        %v338 = vmul.f32 %v337, %v335
        %v339 = vmul.f32 %v338, %v337
        %v340 = vmul.f32 0.5, %v339
        %v341 = vsub.f32 1.5, %v340
        %v342 = vmul.f32 %v337, %v341
        %vm343 = vweird.f32 %v335
        %vm344 = vweird.f32 %v337
        %vm345 = vmor %vm343, %vm344
        %v346 = vsel %vm345, %v337, %v342
        %v347 = vrsqrt.pop %v336
        %v348 = vmul.f32 %v347, %v336
        %v349 = vmul.f32 %v348, %v347
        %v350 = vmul.f32 0.5, %v349
        %v351 = vsub.f32 1.5, %v350
        %v352 = vmul.f32 %v347, %v351
        %vm353 = vweird.f32 %v336
        %vm354 = vweird.f32 %v347
        %vm355 = vmor %vm353, %vm354
        %v356 = vsel %vm355, %v347, %v352
        %v357 = vld [vmem:[%s246] sm:$0x3]
        %v358 = vld [vmem:[%s256] sm:$0x3]
        %v360 = vperm.slane %v357, 0
        %v361 = vperm.slane %v357, 1
        %v364 = vmul.f32 %v346, %v360
        %v365 = vmul.f32 %v356, %v361
        %v366 = vperm.slane %v364, 0
        %v367 = vperm.slane %v365, 0
        %v368 = vmul.f32 %v317, %v366
        %v369 = vmul.f32 %v318, %v367
        %v371 = vperm.slane %v358, 0
        %v372 = vperm.slane %v358, 1
        %v375 = vadd.f32 %v368, %v371
        %v376 = vadd.f32 %v369, %v372
        %377 = vst [vmem:[%s289] sm:$0xff] %v375
        %378 = vst [vmem:[%s289 + $0x8] sm:$0xff] %v376
        %s379 = sand.u32 %s129, 1
        %s380 = scalar_lea.sflag [#allocation4], %s379
        %s381 = sand.u32 %s129, 1
        %s382 = smul.addr %s381, 16
        %s383 = scalar_lea.vmem [#allocation8], %s382
        // Predicated region
        $region45: #{tpu_custom_call.1} parent=31 // pred_check
          %p384 = pneg %p139
        $region46: #{tpu_custom_call.1} parent=31 // pred_check_branch
          %386 = sbr.rel (%p384) target = $region48
        $region47: #{tpu_custom_call.1} parent=31 // pred_region
          %s387 = smul.u32 2, %s28
          %389 = vsyncadd %s380, 0
          %s390 = smul.addr %s27, 2
          %s391 = sadd.s32 %s387, %s390
          %s392 = smul.addr %s391, 8
          %s393 = scalar_lea.hbm %s3, %s392
          %s395 = sshll.u32 %s383, 4
          %s396 = int_to_ptr.vmem [resolvable:$true] %s395
          %s397 = sshll.u32 %s393, 4
          %s398 = int_to_ptr.hbm [resolvable:$true] %s397
          %400 = dma.vmem_to_hbm [thread:$0]  %s396, 256, %s398, %s380
        $region48: #{tpu_custom_call.1} parent=31 // pred_fallthru
          _
      $region32: #{tpu_custom_call.1} parent=5 // pred_fallthru
        _
      %p401 = scmp.le.s32.totalorder 2, %s18
      // Predicated region
      $region49: #{tpu_custom_call.1} parent=5 // pred_check
        %p402 = pneg %p401
      $region50: #{tpu_custom_call.1} parent=5 // pred_check_branch
        %404 = sbr.rel (%p402) target = $region52
      $region51: #{tpu_custom_call.1} parent=5 // pred_region
        %s405 = ssub.s32 %s18, 2
        // Predicated region
        $region53: #{tpu_custom_call.1} parent=51 // pred_check
          %p406 = pneg %p145
        $region54: #{tpu_custom_call.1} parent=51 // pred_check_branch
          %408 = sbr.rel (%p406) target = $region56
        $region55: #{tpu_custom_call.1} parent=51 // pred_region
          %s409 = sand.u32 %s130, 1
          %s410 = scalar_lea.sflag [#allocation4], %s409
          %s411 = sand.u32 %s130, 1
          %s412 = smul.addr %s411, 16
          %s413 = scalar_lea.vmem [#allocation8], %s412
          %415 = dma.done %s410, 256
        $region56: #{tpu_custom_call.1} parent=51 // pred_fallthru
          _
      $region52: #{tpu_custom_call.1} parent=5 // pred_fallthru
        _
    $region6: #{tpu_custom_call.1} parent=1 // loop_footer
      %s22 = sadd.s32 1, %s18
    $region7: #{tpu_custom_call.1} parent=1 // loop_footer_branch
      %17 = sbr.rel target = $region3
    $region8: #{tpu_custom_call.1} parent=1 // loop_exit
      _
    %416 = vsyncpa [#allocation3], 1
    %s417 = scalar_lea.sflag [#allocation3], 1
    %418 = vsyncpa %s417, 1
    %419 = vsyncpa [#allocation6], 1
    %s420 = scalar_lea.sflag [#allocation6], 1
    %421 = vsyncpa %s420, 1
    %422 = vsyncpa [#allocation4], 1
    %s423 = scalar_lea.sflag [#allocation4], 1
    %424 = vsyncpa %s423, 1

</llo_original>
